<compile_context>
chip_gen: v5e
topology: v5e:2x2
jax: 0.10.0
libtpu: 0.0.40
codegen_flags: <defaults>
</compile_context>

<pallas_src>
import jax
import jax.numpy as jnp
from jax.experimental import pallas as pl
from jax.experimental.pallas import tpu as pltpu

SLICE_OFF = 1472          # hardcoded in the reference forward: xx_std = x[:, :, 1472:]
MAX_BLOCK_ROWS = 8192     # rows per streamed block: 8192 x 128 f32 = 4 MiB.  With
                          # double-buffered in+out (16 MiB total) per-step overhead
                          # is <10% even at v7x's ~3.2 TB/s HBM; still ~90%+
                          # efficient on v6e / v5e.
VMEM_LIMIT_BYTES = 40 * 1024 * 1024   # above v5e's 16 MiB default scoped VMEM,
                                      # below v7x's 64 MiB physical VMEM.


def channel_attention_kernel(att_ref, xs_ref, out_ref):
    """One (batch-tile i, channel-tile j) grid step.

    att_ref : (B, D)              resident attention rows (MLP+sigmoid done outside)
    xs_ref  : (b_tile, c_tile, D) streamed input window
    out_ref : (b_tile, c_tile, D) streamed output
    Body is a single broadcast multiply -> VPU-only, fully hidden behind the DMA.
    """
    b_tile = xs_ref.shape[0]
    b0 = pl.program_id(0) * b_tile
    att = att_ref[pl.ds(b0, b_tile), :]                      # (b_tile, D)
    out_ref[...] = (xs_ref[...] * att[:, None, :]).astype(out_ref.dtype)


def _choose_tiles(b, c):
    """Pick (b_tile, c_tile) so the streamed block is ~MAX_BLOCK_ROWS x 128."""
    if c >= MAX_BLOCK_ROWS:
        return 1, MAX_BLOCK_ROWS          # multiple of 8 (and 16 for bf16); ragged
                                          # last channel tile is masked by Pallas.
    c_tile = c                            # full channel dim -> always a legal block
    target_b = max(1, MAX_BLOCK_ROWS // c)
    if target_b >= b:
        return b, c_tile                  # fold the whole batch into one block
    # Largest divisor of b that fits the budget: every batch tile is full, so the
    # in-kernel slice of the resident att buffer never reads out of range.
    b_tile = 1
    for cand in range(1, target_b + 1):
        if b % cand == 0:
            b_tile = cand
    return b_tile, c_tile


@jax.jit
def channel_attention(x, mean_var, std_var, mean_mean, std_mean, params):
    # std_var / mean_mean / std_mean are unused by the reference forward.
    del std_var, mean_mean, std_mean
    w1, b1, w2, b2 = params
    b, c, l = x.shape
    d = mean_var.shape[1]
    assert l - SLICE_OFF == d, "slice width must equal n_channels_in // 2"

    # --- tiny per-batch attention MLP, hoisted out of the kernel -------------
    # att = sigmoid(relu(mean_var @ W1 + b1) @ W2 + b2): ~B*D*R flops and B*D
    # bytes as a plain XLA op (negligible).  Hoisting removes the per-step M=1
    # MXU matmuls, the EUP exp and the approx-sigmoid accuracy caveat entirely.
    h = jnp.maximum(jnp.dot(mean_var, w1, preferred_element_type=jnp.float32) + b1, 0.0)
    att = jax.nn.sigmoid(jnp.dot(h, w2, preferred_element_type=jnp.float32) + b2)
    att = att.astype(x.dtype)                                  # (B, D)

    # Static slice (pure indexing).  With allow_input_fusion on this operand XLA
    # can fuse the slice into the kernel's input DMA instead of materializing an
    # extra (B, C, D) copy in HBM (the dominant tensor of this mem-bound op).
    # TODO(synk): verify in an HLO dump / xprof that the slice actually fuses;
    # if not, fix the upstream layout so the 'std' half (offset 1472 -> lane 64)
    # is stored 128-lane aligned / contiguous per (b, c) row.
    xx_std = x[:, :, SLICE_OFF:]

    b_tile, c_tile = _choose_tiles(b, c)
    grid = (b // b_tile, pl.cdiv(c, c_tile))

    itemsize = jnp.dtype(x.dtype).itemsize
    cost = pl.CostEstimate(
        flops=b * c * d,
        transcendentals=0,
        bytes_accessed=2 * b * c * d * itemsize + b * d * itemsize,
    )

    return pl.pallas_call(
        channel_attention_kernel,
        out_shape=jax.ShapeDtypeStruct((b, c, d), x.dtype),
        grid=grid,
        in_specs=[
            pl.BlockSpec((b, d), lambda i, j: (0, 0)),                 # att resident
            pl.BlockSpec((b_tile, c_tile, d), lambda i, j: (i, j, 0)), # xs streamed
        ],
        out_specs=pl.BlockSpec((b_tile, c_tile, d), lambda i, j: (i, j, 0)),
        compiler_params=pltpu.CompilerParams(
            # Every (batch-tile, channel-tile) block is independent -> both grid
            # axes parallel so v7x can shard steps across its two TensorCores;
            # harmless on single-TC v5e / v6e.
            dimension_semantics=("parallel", "parallel"),
            # Allow the x[:, :, 1472:] slice to fuse into the xs input DMA.
            allow_input_fusion=[False, True],
            vmem_limit_bytes=VMEM_LIMIT_BYTES,
        ),
        cost_estimate=cost,
    )(att, xx_std)


if __name__ == "__main__":
    # Small shapes consistent with the module:
    #   n_channels_in = 2 * D  ->  self.n_channels_in = D = 128
    #   reduction_dim = R = 32
    #   L = 1472 + D so that x[:, :, 1472:] matches att's width (required by the
    #   reference code for the elementwise multiply).
    B, C = 2, 4
    D = 128
    R = 32
    L = SLICE_OFF + D

    key = jax.random.PRNGKey(0)
    kx, kmv, ksv, kmm, ksm, kw1, kb1, kw2, kb2 = jax.random.split(key, 9)

    x = jax.random.normal(kx, (B, C, L), jnp.float32)
    mean_var = jax.random.normal(kmv, (B, D), jnp.float32)
    std_var = jax.random.normal(ksv, (B, D), jnp.float32)    # unused in forward
    mean_mean = jax.random.normal(kmm, (B, D), jnp.float32)  # unused in forward
    std_mean = jax.random.normal(ksm, (B, D), jnp.float32)   # unused in forward

    # Deterministic synthetic parameters for
    # nn.Sequential(Linear(D, R), ReLU(), Linear(R, D)).
    # Stored transposed relative to torch ([in, out]) so the wrapper does x @ W.
    w1 = jax.random.normal(kw1, (D, R), jnp.float32) * 0.05
    b1 = jax.random.normal(kb1, (1, R), jnp.float32) * 0.05
    w2 = jax.random.normal(kw2, (R, D), jnp.float32) * 0.05
    b2 = jax.random.normal(kb2, (1, D), jnp.float32) * 0.05

    out = channel_attention(x, mean_var, std_var, mean_mean, std_mean,
                            (w1, b1, w2, b2))
    out = jax.block_until_ready(out)

    # Pure-JAX reference for a correctness sanity check (exact sigmoid; the
    # kernel no longer uses any approximate math).
    h_ref = jnp.maximum(mean_var @ w1 + b1, 0.0)
    att_ref = jax.nn.sigmoid(h_ref @ w2 + b2)
    ref = x[:, :, SLICE_OFF:] * att_ref[:, None, :]
    assert out.shape == (B, C, D)
    assert jnp.allclose(out, ref, atol=1e-4, rtol=1e-4), "mismatch vs reference"

    print("KERNEL_OK")
</pallas_src>

<mosaic_0001>
module attributes {stable_mosaic.version = 11 : i64} {
  func.func @channel_attention_kernel(%arg0: i32, %arg1: i32, %arg2: memref<2x128xf32, #tpu.memory_space<vmem>>, %arg3: memref<2x4x128xf32, #tpu.memory_space<vmem>>, %arg4: memref<2x4x128xf32, #tpu.memory_space<vmem>>) attributes {dimension_semantics = [#tpu.dimension_semantics<parallel>, #tpu.dimension_semantics<parallel>], iteration_bounds = array<i64: 1, 1>, scalar_prefetch = 0 : i64, scratch_operands = 0 : i64, tpu.core_type = #tpu.core_type<tc>, window_params = [{pipeline_mode = #tpu.pipeline_mode<synchronous>, transform_indices = @transform_0, window_bounds = array<i64: 2, 128>}, {transform_indices = @transform_1, window_bounds = array<i64: 2, 4, 128>}, {transform_indices = @transform_2, window_bounds = array<i64: 2, 4, 128>}]} {
    %c2_i32 = arith.constant 2 : i32
    %0 = arith.muli %arg0, %c2_i32 : i32
    %1 = arith.index_cast %0 : i32 to index
    %c0 = arith.constant 0 : index
    %2 = vector.load %arg2[%1, %c0] : memref<2x128xf32, #tpu.memory_space<vmem>>, vector<2x128xf32>
    %c0_0 = arith.constant 0 : index
    %c0_1 = arith.constant 0 : index
    %c0_2 = arith.constant 0 : index
    %3 = vector.load %arg3[%c0_0, %c0_1, %c0_2] : memref<2x4x128xf32, #tpu.memory_space<vmem>>, vector<2x4x128xf32>
    %4 = vector.shape_cast %2 : vector<2x128xf32> to vector<2x1x128xf32>
    %5 = vector.broadcast %4 : vector<2x1x128xf32> to vector<2x4x128xf32>
    %6 = arith.mulf %3, %5 : vector<2x4x128xf32>
    %c0_3 = arith.constant 0 : index
    %c0_4 = arith.constant 0 : index
    %c0_5 = arith.constant 0 : index
    %7 = vector.load %arg4[%c0_3, %c0_4, %c0_5] : memref<2x4x128xf32, #tpu.memory_space<vmem>>, vector<2x4x128xf32>
    tpu.vector_store %arg4[%c0_3, %c0_4, %c0_5], %6 {strides = array<i32>} : memref<2x4x128xf32, #tpu.memory_space<vmem>>, vector<2x4x128xf32>,
    return
  }
  func.func @transform_0(%arg0: i32, %arg1: i32) -> (i32, i32) {
    %c0_i32 = arith.constant 0 : i32
    %c0_i32_0 = arith.constant 0 : i32
    %c0_i32_1 = arith.constant 0 : i32
    return %c0_i32, %c0_i32_0 : i32, i32
  }
  func.func @transform_1(%arg0: i32, %arg1: i32) -> (i32, i32, i32) {
    %c0_i32 = arith.constant 0 : i32
    %c0_i32_0 = arith.constant 0 : i32
    return %arg0, %arg1, %c0_i32 : i32, i32, i32
  }
  func.func @transform_2(%arg0: i32, %arg1: i32) -> (i32, i32, i32) {
    %c0_i32 = arith.constant 0 : i32
    %c0_i32_0 = arith.constant 0 : i32
    return %arg0, %arg1, %c0_i32 : i32, i32, i32
  }
}

</mosaic_0001>

<llo_original>
// kernel: channel_attention.2
$region0: #{channel_attention.2}
  #allocation0 [shape = 'u32[]', space=smem, size = 0x4, offset = 0x4, fixed_abs, tag = 'smem constant byte address 0x4 - core index']
  #allocation1 [shape = 'u32[72,128]{1,0:T(1,128)}', space=vmem, size = 0x9000, scoped, tag = 'internal scratch']
  #allocation2 [shape = 'u32[2048]{0}', space=vmem, size = 0x2000, scoped, tag = 'scoped memory for channel_attention.2']
  #allocation3 [shape = 'u32[2048]{0}', space=vmem, size = 0x2000, scoped, tag = 'scoped memory for channel_attention.2']
  #allocation4 [shape = 'u32[2048]{0}', space=vmem, size = 0x2000, scoped, tag = 'scoped memory for channel_attention.2']
  #allocation5 [shape = 'u32[2048]{0}', space=vmem, size = 0x2000, scoped, tag = 'scoped memory for channel_attention.2']
  #allocation6 [shape = 'u32[2048]{0}', space=vmem, size = 0x2000, scoped, tag = 'scoped memory for channel_attention.2']
  %s0 = inlined_call_operand.vmem [shape: f32[2,128], index: 0, kind: input, shape index: {}]
  %s1 = inlined_call_operand.hbm [shape: f32[2,4,1600], index: 1, kind: input, shape index: {}]
  %s2 = inlined_call_operand.hbm [shape: f32[2,4,128], index: 2, kind: output, shape index: {}]
  %s3 = sld [smem:[#allocation0]]
  $region22: #{channel_attention.2} parent=0
    _
  %s5 = ssub.s32 1, %s3
  %s6 = scalar_select 0, %s5, %s3
  $region1: #{channel_attention.2} parent=0
    #allocation7 [shape = 'u8[8192]{0}', space=vmem, size = 0x2000, scoped, tag = 'operand span for operand 1']
    #allocation8 [shape = 's32[1]{0}', space=sflag, size = 0x4, scoped, tag = 'scoped memory for channel_attention.2']
    #allocation9 [shape = 's32[1]{0}', space=sflag, size = 0x4, scoped, tag = 'scoped memory for channel_attention.2']
    #allocation10 [shape = 'u8[4096]{0}', space=vmem, size = 0x1000, scoped, tag = 'output window, operand 0, single buffered']
    #allocation11 [shape = 'u8[4096]{0}', space=vmem, size = 0x1000, dematerialized = true, scoped, tag = 'FusionAdapter Buffer %fusion.1 = f32[2,4,128]{2,1,0:T(4,128)} fusion(%param_1.1), kind=kLoop, calls=%fused_computation.1.clone, metadata={op_name="jit(channel_attention)/slice" stack_frame_id=12}']
    %7 = vsyncpa [#allocation8], 0
    %8 = vsyncpa [#allocation9], 0
    // Predicated region
    $region2: #{channel_attention.2} parent=1 // pred_check
      _
    $region3: #{channel_attention.2} parent=1 // pred_check_branch
      %10 = sbr.rel (0) target = $region5
    $region4: #{channel_attention.2} parent=1 // pred_region
      _
    $region5: #{channel_attention.2} parent=1 // pred_fallthru
      _
    // Predicated region
    $region6: #{channel_attention.2} parent=1 // pred_check
      _
    $region7: #{channel_attention.2} parent=1 // pred_check_branch
      %12 = sbr.rel (0) target = $region9
    $region8: #{channel_attention.2} parent=1 // pred_region
      %14 = vsyncadd [#allocation8], 0
      %s15 = scalar_lea.hbm %s1, 44
      %s16 = sshll.u32 %s15, 4
      %s17 = int_to_ptr.hbm [resolvable:$true] %s16
      %s18 = sshll.u32 [#allocation7], 4
      %s19 = int_to_ptr.vmem [resolvable:$true] %s18
      %24 = dma.hbm_to_vmem [thread:$0]  %s17, 256, %s19, [#allocation8], 832, 128, 8
    $region9: #{channel_attention.2} parent=1 // pred_fallthru
      _
    // Predicated region
    $region10: #{channel_attention.2} parent=1 // pred_check
      _
    $region11: #{channel_attention.2} parent=1 // pred_check_branch
      %26 = sbr.rel (0) target = $region13
    $region12: #{channel_attention.2} parent=1 // pred_region
      %28 = dma.done [#allocation8], 256
    $region13: #{channel_attention.2} parent=1 // pred_fallthru
      _
    %v29 = vld [vmem:[#allocation7] sm:$0xf]
    %s30 = scalar_lea.vmem [#allocation7], 4
    %v31 = vld [vmem:[%s30] sm:$0xf]
    %v32 = vlaneseq
    %v33 = vand.u32 %v32, 127
    %vm34 = vcmp.lt.s32.totalorder %v33, 64
    %v35 = vsel %vm34, %v31, %v29
    %36 = vrot.lane.b32.xlu0 %v35, 64
    %v37 = vpop.permute.xlu0 %36
    %s39 = ssub.s32 16, 1
    %40 = vst [vmem:[#allocation11] sm:%s39] %v37
    %s41 = scalar_lea.vmem [#allocation7], 8
    %v42 = vld [vmem:[%s41] sm:$0xf]
    %s43 = scalar_lea.vmem [#allocation7], 12
    %v44 = vld [vmem:[%s43] sm:$0xf]
    %v45 = vlaneseq
    %v46 = vand.u32 %v45, 127
    %vm47 = vcmp.lt.s32.totalorder %v46, 64
    %v48 = vsel %vm47, %v44, %v42
    %49 = vrot.lane.b32.xlu0 %v48, 64
    %v50 = vpop.permute.xlu0 %49
    %s51 = scalar_lea.vmem [#allocation11], 4
    %s53 = ssub.s32 16, 1
    %54 = vst [vmem:[%s51] sm:%s53] %v50
    %s55 = smul.u32 0, 2
    %s56 = scalar_lea.vmem %s0, %s55
    %v57 = vld [vmem:[%s56] sm:$0x3]
    %v58 = vld [vmem:[#allocation11] sm:$0xf]
    %v59 = vld [vmem:[#allocation11 + $0x4] sm:$0xf]
    %v61 = vrot.slane %v57, 1
    %v62 = vperm.slane %v57, 0
    %v63 = vperm.slane %v61, 0
    %v66 = vmul.f32 %v58, %v62
    %v67 = vmul.f32 %v59, %v63
    %68 = vst [vmem:[#allocation10] sm:$0xf] %v66
    %69 = vst [vmem:[#allocation10 + $0x4] sm:$0xf] %v67
    // Predicated region
    $region14: #{channel_attention.2} parent=1 // pred_check
      _
    $region15: #{channel_attention.2} parent=1 // pred_check_branch
      %71 = sbr.rel (0) target = $region17
    $region16: #{channel_attention.2} parent=1 // pred_region
      %73 = vsyncadd [#allocation9], 0
      %s74 = sshll.u32 [#allocation10], 4
      %s75 = int_to_ptr.vmem [resolvable:$true] %s74
      %s76 = sshll.u32 %s2, 4
      %s77 = int_to_ptr.hbm [resolvable:$true] %s76
      %82 = dma.vmem_to_hbm [thread:$0]  %s75, 128, %s77, [#allocation9], 64, 64, 4
    $region17: #{channel_attention.2} parent=1 // pred_fallthru
      _
    // Predicated region
    $region18: #{channel_attention.2} parent=1 // pred_check
      _
    $region19: #{channel_attention.2} parent=1 // pred_check_branch
      %84 = sbr.rel (0) target = $region21
    $region20: #{channel_attention.2} parent=1 // pred_region
      %86 = dma.done [#allocation9], 128
    $region21: #{channel_attention.2} parent=1 // pred_fallthru
      _
    %87 = vsyncpa [#allocation8], 1
    %88 = vsyncpa [#allocation9], 1

</llo_original>
